<compile_context>
chip_gen: v6e
topology: v6e:2x2x1
jax: 0.10.0
libtpu: 0.0.40
codegen_flags: <defaults>
</compile_context>

<pallas_src>
import functools

import jax
import jax.numpy as jnp
from jax.experimental import pallas as pl
from jax.experimental.pallas import tpu as pltpu


def _mlp_kernel(x_ref, w1_ref, b1_ref, w2_ref, b2_ref, o_ref):
    # x_ref:  (TB, in_dim)       VMEM, streamed per grid step (f32 or bf16)
    # w1_ref: (in_dim, hidden)   VMEM, resident
    # b1_ref: (1, hidden)        VMEM, resident
    # w2_ref: (1, hidden)        VMEM, resident (nn.Linear(hidden, 1).weight layout)
    # b2_ref: (1, 1)             SMEM scalar
    # o_ref:  (1, 1, TB)         VMEM, lane-dense output tile
    x = x_ref[...]
    w1 = w1_ref[...]
    if x.dtype != w1.dtype:
        # Promote in-register only; x's HBM traffic stays at its (possibly bf16) width.
        ct = jnp.promote_types(x.dtype, w1.dtype)
        x = x.astype(ct)
        w1 = w1.astype(ct)

    # Layer 1: Linear + ReLU (MXU, f32 accumulation).
    h = jnp.dot(x, w1, preferred_element_type=jnp.float32) + b1_ref[...].astype(jnp.float32)
    h = jnp.maximum(h, 0.0)

    # Dropout is identity at inference time.
    # TODO(synk): training-mode dropout (p=0.2) would need pltpu.prng_random_bits + mask.

    # Output layer Linear(hidden, 1): VPU multiply + reduce over hidden instead of an
    # N=1 MXU matmul.  The sublane->lane relayout into the lane-dense o tile is XLU
    # work that should hide under the x DMA at large TB (measure before changing).
    out = jnp.sum(h * w2_ref[...].astype(jnp.float32), axis=-1) + b2_ref[0, 0]  # (TB,)
    o_ref[0, 0, :] = out.astype(o_ref.dtype)


def _round_up(x, m):
    return ((x + m - 1) // m) * m


@functools.partial(jax.jit, static_argnames=("tb", "x_buffers"))
def binary_classification_forward(x, w1, b1, w2, b2, *, tb=8192, x_buffers=2):
    """x: (B, in_dim) f32 or bf16. Returns (B,) f32, matching `x.reshape(-1)`."""
    B, in_dim = x.shape
    hidden = w1.shape[1]
    itemsize = jnp.dtype(x.dtype).itemsize
    # Sublane multiple for the streamed x block: 8 for 4-byte, 16 for 2-byte, 32 for 1-byte.
    sub = {4: 8, 2: 16, 1: 32}.get(itemsize, 8)

    # Batch tile: multiple of `sub` sublanes, capped at `tb`.
    TB = min(tb, _round_up(B, sub))
    # v7x megacore: once the batch is big enough that per-step overhead is negligible,
    # keep >= 2 tiles so the "parallel" axis can shard across both TensorCores.
    if B >= 4096 and pl.cdiv(B, TB) < 2:
        TB = _round_up((B + 1) // 2, sub)
    num_tiles = pl.cdiv(B, TB)  # no wrapper-side padding; Pallas handles the tail block

    # VMEM budget for the real lane-padded footprint (+ headroom), clamped to stay
    # under v7x's 64 MiB physical VMEM while raising v5e/v6e defaults.
    def _lane_pad(n):
        return _round_up(n, 128)

    vmem_est = (
        x_buffers * TB * _lane_pad(in_dim) * itemsize     # streamed x buffers
        + 2 * TB * _lane_pad(hidden) * 4                  # h intermediate (f32)
        + 2 * _lane_pad(TB) * 4                           # double-buffered out tile
        + 2 * (_round_up(in_dim, 8) + 2) * _lane_pad(hidden) * 4  # resident weights
        + (4 << 20)                                       # headroom
    )
    vmem_limit = int(min(max(vmem_est, 32 << 20), 56 << 20))

    if x_buffers == 2:
        x_spec = pl.BlockSpec((TB, in_dim), lambda i: (i, 0))
    else:
        # v5e knob: deeper x pipeline hides DMA jitter on the lowest-BW HBM.
        x_spec = pl.BlockSpec((TB, in_dim), lambda i: (i, 0),
                              pipeline_mode=pl.Buffered(x_buffers))

    out = pl.pallas_call(
        _mlp_kernel,
        out_shape=jax.ShapeDtypeStruct((num_tiles, 1, TB), jnp.float32),
        grid_spec=pl.GridSpec(
            grid=(num_tiles,),
            in_specs=[
                x_spec,                                               # x: streamed
                pl.BlockSpec((in_dim, hidden), lambda i: (0, 0)),     # w1: resident
                pl.BlockSpec((1, hidden), lambda i: (0, 0)),          # b1: resident
                pl.BlockSpec((1, hidden), lambda i: (0, 0)),          # w2 row: resident
                pl.BlockSpec(memory_space=pltpu.MemorySpace.SMEM),    # b2: scalar
            ],
            out_specs=pl.BlockSpec((1, 1, TB), lambda i: (i, 0, 0)),  # lane-dense out
        ),
        compiler_params=pltpu.CompilerParams(
            dimension_semantics=("parallel",),
            vmem_limit_bytes=vmem_limit,
        ),
    )(x, w1, b1, w2, b2)

    # Tail rows beyond B (from the partial boundary block) are garbage; slice them off.
    return out.reshape(-1)[:B]


def init_params(key, in_dim, hidden_dim):
    """PyTorch-Linear-style init: U(-1/sqrt(fan_in), 1/sqrt(fan_in)).

    w1 stored pre-transposed as (in_dim, hidden); w2 kept in PyTorch layout (1, hidden).
    """
    k1, k2, k3, k4 = jax.random.split(key, 4)
    bound1 = 1.0 / jnp.sqrt(in_dim)
    bound2 = 1.0 / jnp.sqrt(hidden_dim)
    w1 = jax.random.uniform(k1, (in_dim, hidden_dim), jnp.float32, -bound1, bound1)
    b1 = jax.random.uniform(k2, (1, hidden_dim), jnp.float32, -bound1, bound1)
    w2 = jax.random.uniform(k3, (1, hidden_dim), jnp.float32, -bound2, bound2)
    b2 = jax.random.uniform(k4, (1, 1), jnp.float32, -bound2, bound2)
    return w1, b1, w2, b2


if __name__ == "__main__":
    in_dim, hidden_dim = 16, 32

    key = jax.random.PRNGKey(0)
    kx1, kx2, kx3, kp = jax.random.split(key, 4)
    w1, b1, w2, b2 = init_params(kp, in_dim, hidden_dim)

    def reference(x):
        h = jnp.maximum(x @ w1 + b1, 0.0)
        return (h @ w2.T + b2[0, 0]).reshape(-1)

    # 1) Small single-tile case (batch=8), f32, tight tolerance.
    x_small = jax.random.normal(kx1, (8, in_dim), jnp.float32)
    out_small = jax.block_until_ready(
        binary_classification_forward(x_small, w1, b1, w2, b2))
    assert out_small.shape == (8,)
    assert jnp.allclose(out_small, reference(x_small), atol=1e-5, rtol=1e-5)

    # 2) Multi-tile case with a ragged tail (300 rows, tb=128): exercises the
    #    pad-free boundary-block path.
    x_big = jax.random.normal(kx2, (300, in_dim), jnp.float32)
    out_big = jax.block_until_ready(
        binary_classification_forward(x_big, w1, b1, w2, b2, tb=128))
    assert out_big.shape == (300,)
    assert jnp.allclose(out_big, reference(x_big), atol=1e-5, rtol=1e-5)

    # 3) bf16 input from the producer (no wrapper cast): exercises the >=2-tile
    #    megacore split (B=5000 > 4096) plus the narrow-dtype x path.
    x_bf16 = jax.random.normal(kx3, (5000, in_dim), jnp.float32).astype(jnp.bfloat16)
    out_bf16 = jax.block_until_ready(
        binary_classification_forward(x_bf16, w1, b1, w2, b2))
    assert out_bf16.shape == (5000,)
    assert jnp.allclose(out_bf16, reference(x_bf16.astype(jnp.float32)),
                        atol=1e-3, rtol=1e-3)

    print("KERNEL_OK")
</pallas_src>

<mosaic_0001>
module attributes {stable_mosaic.version = 11 : i64} {
  func.func @_mlp_kernel(%arg0: i32, %arg1: memref<8x16xf32, #tpu.memory_space<vmem>>, %arg2: memref<16x32xf32, #tpu.memory_space<vmem>>, %arg3: memref<1x32xf32, #tpu.memory_space<vmem>>, %arg4: memref<1x32xf32, #tpu.memory_space<vmem>>, %arg5: memref<1x1xf32, #tpu.memory_space<smem>>, %arg6: memref<1x1x8xf32, #tpu.memory_space<vmem>>) attributes {dimension_semantics = [#tpu.dimension_semantics<parallel>], iteration_bounds = array<i64: 1>, scalar_prefetch = 0 : i64, scratch_operands = 0 : i64, tpu.core_type = #tpu.core_type<tc>, window_params = [{transform_indices = @transform_0, window_bounds = array<i64: 8, 16>}, {pipeline_mode = #tpu.pipeline_mode<synchronous>, transform_indices = @transform_1, window_bounds = array<i64: 16, 32>}, {pipeline_mode = #tpu.pipeline_mode<synchronous>, transform_indices = @transform_2, window_bounds = array<i64: 1, 32>}, {pipeline_mode = #tpu.pipeline_mode<synchronous>, transform_indices = @transform_3, window_bounds = array<i64: 1, 32>}, {transform_indices = @transform_4, window_bounds = array<i64: 1, 1>}, {transform_indices = @transform_5, window_bounds = array<i64: 1, 1, 8>}]} {
    %c0 = arith.constant 0 : index
    %c0_0 = arith.constant 0 : index
    %0 = vector.load %arg1[%c0, %c0_0] : memref<8x16xf32, #tpu.memory_space<vmem>>, vector<8x16xf32>
    %c0_1 = arith.constant 0 : index
    %c0_2 = arith.constant 0 : index
    %1 = vector.load %arg2[%c0_1, %c0_2] : memref<16x32xf32, #tpu.memory_space<vmem>>, vector<16x32xf32>
    %cst = arith.constant dense<0.000000e+00> : vector<8x32xf32>
    %2 = tpu.matmul %0, %1, %cst {dimension_numbers = #tpu.dot_dimension_numbers<[1], [0], [0], [1], [0, 0, 1, 1], [], []>} : vector<8x16xf32>, vector<16x32xf32>, vector<8x32xf32> -> vector<8x32xf32>
    %c0_3 = arith.constant 0 : index
    %c0_4 = arith.constant 0 : index
    %3 = vector.load %arg3[%c0_3, %c0_4] : memref<1x32xf32, #tpu.memory_space<vmem>>, vector<1x32xf32>
    %4 = vector.broadcast %3 : vector<1x32xf32> to vector<8x32xf32>
    %5 = arith.addf %2, %4 : vector<8x32xf32>
    %cst_5 = arith.constant 0.000000e+00 : f32
    %6 = vector.broadcast %cst_5 : f32 to vector<8x32xf32>
    %7 = arith.maximumf %5, %6 : vector<8x32xf32>
    %c0_6 = arith.constant 0 : index
    %c0_7 = arith.constant 0 : index
    %8 = vector.load %arg4[%c0_6, %c0_7] : memref<1x32xf32, #tpu.memory_space<vmem>>, vector<1x32xf32>
    %9 = vector.broadcast %8 : vector<1x32xf32> to vector<8x32xf32>
    %10 = arith.mulf %7, %9 : vector<8x32xf32>
    %cst_8 = arith.constant dense<0.000000e+00> : vector<8xf32>
    %11 = vector.multi_reduction <add>, %10, %cst_8 [1] : vector<8x32xf32> to vector<8xf32>
    %c0_9 = arith.constant 0 : index
    %c0_10 = arith.constant 0 : index
    %12 = memref.load %arg5[%c0_9, %c0_10] : memref<1x1xf32, #tpu.memory_space<smem>>
    %13 = vector.broadcast %12 : f32 to vector<8xf32>
    %14 = arith.addf %11, %13 : vector<8xf32>
    %c0_11 = arith.constant 0 : index
    %c0_12 = arith.constant 0 : index
    %c0_13 = arith.constant 0 : index
    %15 = vector.load %arg6[%c0_11, %c0_12, %c0_13] : memref<1x1x8xf32, #tpu.memory_space<vmem>>, vector<1x1x8xf32>
    %16 = vector.shape_cast %15 : vector<1x1x8xf32> to vector<8xf32>
    %17 = vector.shape_cast %14 : vector<8xf32> to vector<1x1x8xf32>
    tpu.vector_store %arg6[%c0_11, %c0_12, %c0_13], %17 {strides = array<i32>} : memref<1x1x8xf32, #tpu.memory_space<vmem>>, vector<1x1x8xf32>,
    return
  }
  func.func @transform_0(%arg0: i32) -> (i32, i32) {
    %c0_i32 = arith.constant 0 : i32
    %c0_i32_0 = arith.constant 0 : i32
    return %arg0, %c0_i32 : i32, i32
  }
  func.func @transform_1(%arg0: i32) -> (i32, i32) {
    %c0_i32 = arith.constant 0 : i32
    %c0_i32_0 = arith.constant 0 : i32
    %c0_i32_1 = arith.constant 0 : i32
    return %c0_i32, %c0_i32_0 : i32, i32
  }
  func.func @transform_2(%arg0: i32) -> (i32, i32) {
    %c0_i32 = arith.constant 0 : i32
    %c0_i32_0 = arith.constant 0 : i32
    %c0_i32_1 = arith.constant 0 : i32
    return %c0_i32, %c0_i32_0 : i32, i32
  }
  func.func @transform_3(%arg0: i32) -> (i32, i32) {
    %c0_i32 = arith.constant 0 : i32
    %c0_i32_0 = arith.constant 0 : i32
    %c0_i32_1 = arith.constant 0 : i32
    return %c0_i32, %c0_i32_0 : i32, i32
  }
  func.func @transform_4(%arg0: i32) -> (i32, i32) {
    %c0_i32 = arith.constant 0 : i32
    %c0_i32_0 = arith.constant 0 : i32
    %c0_i32_1 = arith.constant 0 : i32
    return %c0_i32, %c0_i32_0 : i32, i32
  }
  func.func @transform_5(%arg0: i32) -> (i32, i32, i32) {
    %c0_i32 = arith.constant 0 : i32
    %c0_i32_0 = arith.constant 0 : i32
    %c0_i32_1 = arith.constant 0 : i32
    return %arg0, %c0_i32, %c0_i32_0 : i32, i32, i32
  }
}

</mosaic_0001>

<llo_original>
// kernel: binary_classification_forward.1
$region0: #{binary_classification_forward.1}
  #allocation0 [shape = 'u32[]', space=smem, size = 0x4, offset = 0x4, fixed_abs, tag = 'smem constant byte address 0x4 - core index']
  #allocation1 [shape = 'u32[144,128]{1,0:T(1,128)}', space=vmem, size = 0x12000, scoped, tag = 'internal scratch']
  #allocation2 [shape = 'f32[1,1]{1,0:T(1,128)S(6)}', space=smem, size = 0x200, scoped, tag = 'scoped memory for binary_classification_forward.1']
  %s0 = inlined_call_operand.hbm [shape: f32[8,16], index: 0, kind: input, shape index: {}]
  %s1 = inlined_call_operand.hbm [shape: f32[16,32], index: 1, kind: input, shape index: {}]
  %s2 = inlined_call_operand.vmem [shape: f32[1,32], index: 2, kind: input, shape index: {}]
  %s3 = inlined_call_operand.vmem [shape: f32[1,32], index: 3, kind: input, shape index: {}]
  %s4 = inlined_call_operand.<no memory space> [shape: f32[1,1], index: 4, kind: input, shape index: {}]
  %s5 = inlined_call_operand.hbm [shape: f32[1,1,8], index: 5, kind: output, shape index: {}]
  %s6 = sld [smem:[#allocation0]]
  $region38: #{binary_classification_forward.1} parent=0
    _
  %s8 = ssub.s32 1, %s6
  %s9 = scalar_select 0, %s8, %s6
  %10 = sst [smem:[#allocation2]] %s4
  $region1: #{binary_classification_forward.1} parent=0
    #allocation3 [shape = 'u8[4096]{0}', space=vmem, size = 0x1000, scoped, tag = 'input window, operand 0, single buffered']
    #allocation4 [shape = 's32[1]{0}', space=sflag, size = 0x4, scoped, tag = 'scoped memory for binary_classification_forward.1']
    #allocation5 [shape = 's32[1]{0}', space=sflag, size = 0x4, scoped, tag = 'scoped memory for binary_classification_forward.1']
    #allocation6 [shape = 'u8[8192]{0}', space=vmem, size = 0x2000, scoped, tag = 'input window, operand 1, single buffered']
    #allocation7 [shape = 's32[1]{0}', space=sflag, size = 0x4, scoped, tag = 'scoped memory for binary_classification_forward.1']
    #allocation8 [shape = 'u8[512]{0}', space=vmem, size = 0x400, scoped, tag = 'output window, operand 0, single buffered']
    %11 = vsyncpa [#allocation4], 0
    %12 = vsyncpa [#allocation7], 0
    %13 = vsyncpa [#allocation5], 0
    // Predicated region
    $region2: #{binary_classification_forward.1} parent=1 // pred_check
      _
    $region3: #{binary_classification_forward.1} parent=1 // pred_check_branch
      %15 = sbr.rel (0) target = $region5
    $region4: #{binary_classification_forward.1} parent=1 // pred_region
      %s17 = ssub.s32 128, 128
      %18 = vsyncadd [#allocation4], %s17
      %s20 = sshll.u32 [#allocation3], 4
      %s21 = int_to_ptr.vmem [resolvable:$true] %s20
      %23 = dma.hbm_to_vmem [thread:$0]  %s0, 128, %s21, [#allocation4]
    $region5: #{binary_classification_forward.1} parent=1 // pred_fallthru
      _
    // Predicated region
    $region6: #{binary_classification_forward.1} parent=1 // pred_check
      _
    $region7: #{binary_classification_forward.1} parent=1 // pred_check_branch
      %25 = sbr.rel (0) target = $region9
    $region8: #{binary_classification_forward.1} parent=1 // pred_region
      %s27 = ssub.s32 256, 256
      %28 = vsyncadd [#allocation7], %s27
      %s29 = sshll.u32 [#allocation6], 4
      %s30 = int_to_ptr.vmem [resolvable:$true] %s29
      %35 = dma.hbm_to_vmem [thread:$0]  %s1, 256, %s30, [#allocation7], 128, 128, 8
    $region9: #{binary_classification_forward.1} parent=1 // pred_fallthru
      _
    // Predicated region
    $region10: #{binary_classification_forward.1} parent=1 // pred_check
      _
    $region11: #{binary_classification_forward.1} parent=1 // pred_check_branch
      %37 = sbr.rel (0) target = $region13
    $region12: #{binary_classification_forward.1} parent=1 // pred_region
      _
    $region13: #{binary_classification_forward.1} parent=1 // pred_fallthru
      _
    // Predicated region
    $region14: #{binary_classification_forward.1} parent=1 // pred_check
      _
    $region15: #{binary_classification_forward.1} parent=1 // pred_check_branch
      %39 = sbr.rel (0) target = $region17
    $region16: #{binary_classification_forward.1} parent=1 // pred_region
      _
    $region17: #{binary_classification_forward.1} parent=1 // pred_fallthru
      _
    // Predicated region
    $region18: #{binary_classification_forward.1} parent=1 // pred_check
      _
    $region19: #{binary_classification_forward.1} parent=1 // pred_check_branch
      %41 = sbr.rel (0) target = $region21
    $region20: #{binary_classification_forward.1} parent=1 // pred_region
      _
    $region21: #{binary_classification_forward.1} parent=1 // pred_fallthru
      _
    // Predicated region
    $region22: #{binary_classification_forward.1} parent=1 // pred_check
      _
    $region23: #{binary_classification_forward.1} parent=1 // pred_check_branch
      %43 = sbr.rel (0) target = $region25
    $region24: #{binary_classification_forward.1} parent=1 // pred_region
      %44 = dma.done [#allocation4], 128
    $region25: #{binary_classification_forward.1} parent=1 // pred_fallthru
      _
    // Predicated region
    $region26: #{binary_classification_forward.1} parent=1 // pred_check
      _
    $region27: #{binary_classification_forward.1} parent=1 // pred_check_branch
      %46 = sbr.rel (0) target = $region29
    $region28: #{binary_classification_forward.1} parent=1 // pred_region
      %47 = dma.done [#allocation7], 256
    $region29: #{binary_classification_forward.1} parent=1 // pred_fallthru
      _
    %v48 = vld [vmem:[#allocation3] sm:$0xff]
    %v49 = vld [vmem:[#allocation6] sm:$0xff]
    %v50 = vld [vmem:[#allocation6 + $0x8] sm:$0xff]
    %v51 = vld [vmem:[%s2] sm:$0x1]
    %v53 = vlaneseq
    %v54 = vshrl.u32 %v53, 7
    %v55 = vsub.s32 0, %v54
    %v56 = vrot.slane %v51, %v55
    %vm58 = vcmask 130048
    %v60 = vsel %vm58, %v48, 0
    %62 = vmatprep.subr.mxu0 0.0
    %63 = vmatpush1.msra.mxu0 0.0
    %64 = vmatprep.subr.mxu0 0.0
    %65 = vmatpush1.msra.mxu0 0.0
    %66 = vmatprep.subr.mxu0 0.0
    %67 = vmatpush1.msra.mxu0 0.0
    %68 = vmatprep.subr.mxu0 0.0
    %69 = vmatpush1.msra.mxu0 0.0
    %70 = vmatprep.subr.mxu0 0.0
    %71 = vmatpush1.msra.mxu0 0.0
    %72 = vmatprep.subr.mxu0 0.0
    %73 = vmatpush1.msra.mxu0 0.0
    %74 = vmatprep.subr.mxu0 0.0
    %75 = vmatpush1.msra.mxu0 0.0
    %76 = vmatprep.subr.mxu0 0.0
    %77 = vmatpush1.msra.mxu0 0.0
    %78 = vmatprep.subr.mxu0 0.0
    %79 = vmatpush1.msra.mxu0 0.0
    %80 = vmatprep.subr.mxu0 0.0
    %81 = vmatpush1.msra.mxu0 0.0
    %82 = vmatprep.subr.mxu0 0.0
    %83 = vmatpush1.msra.mxu0 0.0
    %84 = vmatprep.subr.mxu0 0.0
    %85 = vmatpush1.msra.mxu0 0.0
    %86 = vmatprep.subr.mxu0 0.0
    %87 = vmatpush1.msra.mxu0 0.0
    %88 = vmatprep.subr.mxu0 0.0
    %89 = vmatpush1.msra.mxu0 0.0
    %90 = vmatprep.subr.mxu0 0.0
    %91 = vmatpush1.msra.mxu0 %v50
    %92 = vmatprep.subr.mxu0 0.0
    %93 = vmatpush1.msra.mxu0 %v49
    %94 = vmatprep.subr.mxu0 0.0
    %95 = vmatpush2.msra.mxu0 0.0
    %96 = vmatprep.subr.mxu0 0.0
    %97 = vmatpush2.msra.mxu0 0.0
    %98 = vmatprep.subr.mxu0 0.0
    %99 = vmatpush2.msra.mxu0 0.0
    %100 = vmatprep.subr.mxu0 0.0
    %101 = vmatpush2.msra.mxu0 0.0
    %102 = vmatprep.subr.mxu0 0.0
    %103 = vmatpush2.msra.mxu0 0.0
    %104 = vmatprep.subr.mxu0 0.0
    %105 = vmatpush2.msra.mxu0 0.0
    %106 = vmatprep.subr.mxu0 0.0
    %107 = vmatpush2.msra.mxu0 0.0
    %108 = vmatprep.subr.mxu0 0.0
    %109 = vmatpush2.msra.mxu0 0.0
    %110 = vmatprep.subr.mxu0 0.0
    %111 = vmatpush2.msra.mxu0 0.0
    %112 = vmatprep.subr.mxu0 0.0
    %113 = vmatpush2.msra.mxu0 0.0
    %114 = vmatprep.subr.mxu0 0.0
    %115 = vmatpush2.msra.mxu0 0.0
    %116 = vmatprep.subr.mxu0 0.0
    %117 = vmatpush2.msra.mxu0 0.0
    %118 = vmatprep.subr.mxu0 0.0
    %119 = vmatpush2.msra.mxu0 0.0
    %120 = vmatprep.subr.mxu0 0.0
    %121 = vmatpush2.msra.mxu0 0.0
    %122 = vmatprep.subr.mxu0 0.0
    %123 = vmatpush2.msra.mxu0 0.0
    %124 = vmatprep.subr.mxu0 0.0
    %125 = vmatpush2.msra.mxu0 0.0
    %126 = vmatprep.mubr.f32.mxu0 0.0
    %127 = vmatmul.mubr.f32.gmra.mxu0 %v60
    %v128 = vpop.f32.mrf.mxu0
    %v129 = vadd.f32 %v56, %v128
    %v130 = vpop.f32.mrf.mxu0
    %131 = vdwg.mxu0
    %v132 = vmax.f32 %v129, 0.0
    %v133 = vld [vmem:[%s3] sm:$0x1]
    %v135 = vlaneseq
    %v136 = vshrl.u32 %v135, 7
    %v137 = vsub.s32 0, %v136
    %v138 = vrot.slane %v133, %v137
    %v140 = vmul.f32 %v132, %v138
    %vm141 = vcmask 261120
    %v142 = vsel %vm141, %v140, 0.0
    %143 = vadd.xlane.f32.xlu0 %v142
    %v144 = vpop.xlane.xlu0 %143
    %s145 = sld [smem:[#allocation2]]
    %v146 = vstv %s145
    %v147 = vadd.f32 %v144, %v146
    %v149 = vlaneseq
    %v150 = vand.u32 %v149, 127
    %v151 = vlaneseq
    %v152 = vshrl.u32 %v151, 7
    %v153 = vsub.s32 %v150, %v152
    %v154 = vrot.slane %v147, %v153
    %vm156 = vcmask 57344
    %157 = vst.msk [vmem:[#allocation8] sm:$0x1] %vm156, %v154
    // Predicated region
    $region30: #{binary_classification_forward.1} parent=1 // pred_check
      _
    $region31: #{binary_classification_forward.1} parent=1 // pred_check_branch
      %159 = sbr.rel (0) target = $region33
    $region32: #{binary_classification_forward.1} parent=1 // pred_region
      %s161 = ssub.s32 16, 16
      %162 = vsyncadd [#allocation5], %s161
      %s164 = sshll.u32 [#allocation8], 4
      %s165 = int_to_ptr.vmem [resolvable:$true] %s164
      %167 = dma.vmem_to_hbm [thread:$0]  %s165, 16, %s5, [#allocation5]
    $region33: #{binary_classification_forward.1} parent=1 // pred_fallthru
      _
    // Predicated region
    $region34: #{binary_classification_forward.1} parent=1 // pred_check
      _
    $region35: #{binary_classification_forward.1} parent=1 // pred_check_branch
      %169 = sbr.rel (0) target = $region37
    $region36: #{binary_classification_forward.1} parent=1 // pred_region
      %170 = dma.done [#allocation5], 16
    $region37: #{binary_classification_forward.1} parent=1 // pred_fallthru
      _
    %171 = vsyncpa [#allocation4], 1
    %172 = vsyncpa [#allocation7], 1
    %173 = vsyncpa [#allocation5], 1

</llo_original>
